<compile_context>
chip_gen: v6e
topology: v6e:2x2x1
jax: 0.10.0
libtpu: 0.0.40
codegen_flags: <defaults>
</compile_context>

<pallas_src>
import functools

import jax
import jax.numpy as jnp
from jax.experimental import pallas as pl
from jax.experimental.pallas import tpu as pltpu

_LANES = 128
_TARGET_TILE_BYTES = 2 * 1024 * 1024   # ~2 MiB per tile: past the overhead knee
_MIN_SPLIT_TILE_BYTES = 512 * 1024     # don't shrink tiles below this to parallelize
_VMEM_LIMIT_BYTES = 32 * 1024 * 1024


def _sine_kernel(x_ref, o_ref, *, omega0):
    # Elementwise hot path: upcast to f32 for the sin evaluation, cast back to
    # the storage dtype on the way out (no-op for f32 inputs).
    x = x_ref[...].astype(jnp.float32)
    o_ref[...] = jnp.sin(omega0 * x).astype(o_ref.dtype)


def _sublane_multiple(dtype):
    itemsize = jnp.dtype(dtype).itemsize
    if itemsize >= 4:
        return 8
    if itemsize == 2:
        return 16
    return 32


def _num_tensorcores():
    """Best-effort TensorCores-per-chip (v7x = 2; v5e/v6e = 1)."""
    try:
        kind = jax.devices()[0].device_kind.lower()
    except Exception:
        return 1
    return 2 if "v7" in kind else 1


def _pick_tile(dim, unit, target):
    """Largest legal block extent <= target: a multiple of `unit`, or the
    full dim (always legal regardless of divisibility)."""
    if target >= dim:
        return dim
    t = max(unit, (target // unit) * unit)
    return min(t, dim)


def sine_layer(x, omega0=0.01, *, target_tile_bytes=_TARGET_TILE_BYTES,
               min_pallas_bytes=1 << 20, force_pallas=False):
    """Applies y = sin(omega0 * x) elementwise via a Pallas TPU kernel.

    x: any shape / float dtype. Returns same shape & dtype.
    """
    orig_shape = x.shape
    dtype = x.dtype
    n = x.size
    itemsize = jnp.dtype(dtype).itemsize

    # Tiny tensors: pallas_call setup overhead dwarfs the work and a
    # standalone custom call blocks XLA fusion — let XLA handle it.
    if n == 0 or x.ndim == 0 or (not force_pallas and n * itemsize < min_pallas_bytes):
        return jnp.sin(omega0 * x)

    # Pick a free (row-major, no-copy) 2D view. Prefer a lane-dense
    # (rows, 128) slab; otherwise keep the original last dim as the lane axis
    # (legal as a block dim because it equals the full array dim), avoiding
    # any pad/slice HBM round trips.
    if n % _LANES == 0:
        rows, cols = n // _LANES, _LANES
    elif x.ndim >= 2:
        rows, cols = n // orig_shape[-1], orig_shape[-1]
    else:
        rows, cols = 1, n

    row_bytes = cols * itemsize
    if row_bytes > target_tile_bytes:
        # Pathological shape (huge non-128-divisible 1-D input): one row no
        # longer fits a tile. Rare; fall back rather than padding whole array.
        # TODO(synk): tile the lane axis with a masked cdiv edge block instead.
        return jnp.sin(omega0 * x)

    x2d = x.reshape(rows, cols)
    sub = _sublane_multiple(dtype)

    # Byte-budget-based tile rows (dtype-independent ~2 MiB tiles).
    tile_rows = _pick_tile(rows, sub, max(sub, target_tile_bytes // row_bytes))

    # Only split the grid for parallelism when the chip really has 2 TCs
    # (v7x). Aim for >=4 steps (>=2 per core) so each core's pipeline fills,
    # but never shrink a step below ~512 KiB of traffic.
    if _num_tensorcores() >= 2:
        split_target = pl.cdiv(rows, 4)
        floor_rows = max(sub, _MIN_SPLIT_TILE_BYTES // row_bytes)
        if split_target >= floor_rows:
            tile_rows = min(tile_rows, _pick_tile(rows, sub, split_target))

    grid = (pl.cdiv(rows, tile_rows),)
    kernel = functools.partial(_sine_kernel, omega0=float(omega0))

    y2d = pl.pallas_call(
        kernel,
        out_shape=jax.ShapeDtypeStruct((rows, cols), dtype),
        grid_spec=pltpu.PrefetchScalarGridSpec(
            num_scalar_prefetch=0,
            grid=grid,
            in_specs=[pl.BlockSpec((tile_rows, cols), lambda i: (i, 0))],
            out_specs=pl.BlockSpec((tile_rows, cols), lambda i: (i, 0)),
        ),
        compiler_params=pltpu.CompilerParams(
            dimension_semantics=("parallel",),
            vmem_limit_bytes=_VMEM_LIMIT_BYTES,
        ),
        cost_estimate=pl.CostEstimate(
            flops=n,                       # the omega0 * x multiply
            transcendentals=n,             # one sin per element
            bytes_accessed=2 * n * itemsize,
        ),
    )(x2d)

    return y2d.reshape(orig_shape)


if __name__ == "__main__":
    # SineLayer has no learnable parameters; omega0 is a hyperparameter.
    omega0 = 0.01

    key = jax.random.PRNGKey(0)

    # 1) NCHW f32 input whose element count is a multiple of 128
    #    (lane-dense (rows, 128) path).
    x = jax.random.normal(key, (2, 4, 16, 16), dtype=jnp.float32)
    y = jax.block_until_ready(sine_layer(x, omega0=omega0, force_pallas=True))
    y_ref = jnp.sin(omega0 * x)
    assert y.shape == x.shape and y.dtype == x.dtype
    assert jnp.allclose(y, y_ref, atol=1e-6, rtol=1e-6)

    # 2) Odd-sized input (n % 128 != 0): exercises the no-pad (rows, last_dim)
    #    path; also shrink the tile budget so the cdiv grid has a masked
    #    partial edge block.
    x2 = jax.random.normal(jax.random.PRNGKey(1), (3, 5, 37, 41),
                           dtype=jnp.float32)
    y2 = jax.block_until_ready(
        sine_layer(x2, omega0=omega0, force_pallas=True,
                   target_tile_bytes=8192))
    assert y2.shape == x2.shape and y2.dtype == x2.dtype
    assert jnp.allclose(y2, jnp.sin(omega0 * x2), atol=1e-6, rtol=1e-6)

    # 3) bf16 input: exercises the dtype-aware sublane multiple and the
    #    f32-compute / cast-on-store path.
    x3 = jax.random.normal(jax.random.PRNGKey(2), (4, 8, 32),
                           dtype=jnp.bfloat16)
    y3 = jax.block_until_ready(sine_layer(x3, omega0=omega0, force_pallas=True))
    y3_ref = jnp.sin(omega0 * x3.astype(jnp.float32)).astype(jnp.bfloat16)
    assert y3.shape == x3.shape and y3.dtype == x3.dtype
    assert jnp.allclose(y3.astype(jnp.float32), y3_ref.astype(jnp.float32),
                        atol=1e-2, rtol=1e-2)

    print("KERNEL_OK")
</pallas_src>

<mosaic_0001>
module attributes {stable_mosaic.version = 11 : i64} {
  func.func @_sine_kernel(%arg0: i32, %arg1: memref<16x128xf32, #tpu.memory_space<vmem>>, %arg2: memref<16x128xf32, #tpu.memory_space<vmem>>) attributes {dimension_semantics = [#tpu.dimension_semantics<parallel>], iteration_bounds = array<i64: 1>, scalar_prefetch = 0 : i64, scratch_operands = 0 : i64, tpu.core_type = #tpu.core_type<tc>, window_params = [{transform_indices = @transform_0, window_bounds = array<i64: 16, 128>}, {transform_indices = @transform_1, window_bounds = array<i64: 16, 128>}]} {
    %c0 = arith.constant 0 : index
    %c0_0 = arith.constant 0 : index
    %0 = vector.load %arg1[%c0, %c0_0] : memref<16x128xf32, #tpu.memory_space<vmem>>, vector<16x128xf32>
    %cst = arith.constant 0.00999999977 : f32
    %1 = vector.broadcast %cst : f32 to vector<16x128xf32>
    %2 = arith.mulf %1, %0 : vector<16x128xf32>
    %3 = math.sin %2 : vector<16x128xf32>
    %c0_1 = arith.constant 0 : index
    %c0_2 = arith.constant 0 : index
    %4 = vector.load %arg2[%c0_1, %c0_2] : memref<16x128xf32, #tpu.memory_space<vmem>>, vector<16x128xf32>
    tpu.vector_store %arg2[%c0_1, %c0_2], %3 {strides = array<i32>} : memref<16x128xf32, #tpu.memory_space<vmem>>, vector<16x128xf32>,
    return
  }
  func.func @transform_0(%arg0: i32) -> (i32, i32) {
    %c0_i32 = arith.constant 0 : i32
    %c0_i32_0 = arith.constant 0 : i32
    return %arg0, %c0_i32 : i32, i32
  }
  func.func @transform_1(%arg0: i32) -> (i32, i32) {
    %c0_i32 = arith.constant 0 : i32
    %c0_i32_0 = arith.constant 0 : i32
    return %arg0, %c0_i32 : i32, i32
  }
}

</mosaic_0001>

<llo_original>
// kernel: tpu_custom_call.1
$region0: #{tpu_custom_call.1}
  #allocation0 [shape = 'u32[]', space=smem, size = 0x4, offset = 0x4, fixed_abs, tag = 'smem constant byte address 0x4 - core index']
  #allocation1 [shape = 'u32[144,128]{1,0:T(1,128)}', space=vmem, size = 0x12000, scoped, tag = 'internal scratch']
  %s0 = inlined_call_operand.hbm [shape: f32[16,128], index: 0, kind: input, shape index: {}]
  %s1 = inlined_call_operand.hbm [shape: f32[16,128], index: 1, kind: output, shape index: {}]
  %s2 = sld [smem:[#allocation0]]
  $region18: #{tpu_custom_call.1} parent=0
    _
  %s4 = ssub.s32 1, %s2
  %s5 = scalar_select 0, %s4, %s2
  $region1: #{tpu_custom_call.1} parent=0
    #allocation2 [shape = 'u8[8192]{0}', space=vmem, size = 0x2000, scoped, tag = 'input window, operand 0, single buffered']
    #allocation3 [shape = 's32[1]{0}', space=sflag, size = 0x4, scoped, tag = 'scoped memory for tpu_custom_call.1']
    #allocation4 [shape = 's32[1]{0}', space=sflag, size = 0x4, scoped, tag = 'scoped memory for tpu_custom_call.1']
    #allocation5 [shape = 'u8[8192]{0}', space=vmem, size = 0x2000, scoped, tag = 'output window, operand 0, single buffered']
    %6 = vsyncpa [#allocation3], 0
    %7 = vsyncpa [#allocation4], 0
    // Predicated region
    $region2: #{tpu_custom_call.1} parent=1 // pred_check
      _
    $region3: #{tpu_custom_call.1} parent=1 // pred_check_branch
      %9 = sbr.rel (0) target = $region5
    $region4: #{tpu_custom_call.1} parent=1 // pred_region
      %s11 = ssub.s32 256, 256
      %12 = vsyncadd [#allocation3], %s11
      %s13 = sshll.u32 [#allocation2], 4
      %s14 = int_to_ptr.vmem [resolvable:$true] %s13
      %19 = dma.hbm_to_vmem [thread:$0]  %s0, 256, %s14, [#allocation3], 128, 128, 8
    $region5: #{tpu_custom_call.1} parent=1 // pred_fallthru
      _
    // Predicated region
    $region6: #{tpu_custom_call.1} parent=1 // pred_check
      _
    $region7: #{tpu_custom_call.1} parent=1 // pred_check_branch
      %21 = sbr.rel (0) target = $region9
    $region8: #{tpu_custom_call.1} parent=1 // pred_region
      %22 = dma.done [#allocation3], 256
    $region9: #{tpu_custom_call.1} parent=1 // pred_fallthru
      _
    %v23 = vld [vmem:[#allocation2] sm:$0xff]
    %v24 = vld [vmem:[#allocation2 + $0x8] sm:$0xff]
    %v25 = vmul.f32 %v23, 0.01
    %v26 = vmul.f32 %v24, 0.01
    %v27 = vand.u32 2147483647, %v25
    %vm28 = vcmp.le.f32.partialorder %v27, 0.7853982
    %vm29 = vcmp.lt.s32.totalorder %v25, 0
    %v30 = vand.u32 %v25, 2139095040
    %v31 = vshrl.u32 %v30, 23
    %v32 = vsub.s32 %v31, 127
    %v33 = vand.u32 2147483647, %v25
    %v34 = vand.u32 %v33, 8388607
    %v35 = vor.u32 %v34, 8388608
    %v36 = vsub.s32 0, %v35
    %v37 = vadd.s32 %v32, 1
    %vm38 = vcmp.gt.s32.totalorder %v37, 0
    %v39 = vsel %vm38, %v37, 0
    %v40 = vshrl.u32 %v39, 5
    %v41 = vand.u32 %v39, 31
    %v42 = vsub.s32 32, %v41
    %v43 = vshrl.u32 683565275, %v42
    %v44 = vshll.u32 683565275, %v41
    %v45 = vshrl.u32 2475754826, %v42
    %v46 = vor.u32 %v44, %v45
    %v47 = vshll.u32 2475754826, %v41
    %v48 = vshrl.u32 2131351028, %v42
    %v49 = vor.u32 %v47, %v48
    %v50 = vshll.u32 2131351028, %v41
    %v51 = vshrl.u32 2102212464, %v42
    %v52 = vor.u32 %v50, %v51
    %v53 = vshll.u32 2102212464, %v41
    %v54 = vshrl.u32 920167782, %v42
    %v55 = vor.u32 %v53, %v54
    %v56 = vshll.u32 920167782, %v41
    %v57 = vshrl.u32 1326507024, %v42
    %v58 = vor.u32 %v56, %v57
    %vm59 = vcmp.lt.s32.totalorder %v40, 1
    %vm60 = vcmp.lt.s32.totalorder %v40, 2
    %vm61 = vcmp.lt.s32.totalorder %v40, 3
    %vm62 = vcmp.lt.s32.totalorder %v40, 4
    %v63 = vsel %vm59, %v43, %v46
    %v64 = vsel %vm62, %v52, 2102212464
    %v65 = vsel %vm61, %v49, %v64
    %v66 = vsel %vm60, %v63, %v65
    %v67 = vsel %vm59, %v46, %v49
    %v68 = vsel %vm62, %v55, 920167782
    %v69 = vsel %vm61, %v52, %v68
    %v70 = vsel %vm60, %v67, %v69
    %v71 = vsel %vm59, %v49, %v52
    %v72 = vsel %vm62, %v58, 1326507024
    %v73 = vsel %vm61, %v55, %v72
    %v74 = vsel %vm60, %v71, %v73
    %v75 = vshll.u32 %v35, 8
    %v76 = vmul.u32.u64.compose %v75, %v74
    %v77 = vextract.low.u32 %v76
    %v78 = vextract.high.u32 %v76
    %v79 = vmul.u32.u64.compose %v75, %v70
    %v80 = vextract.low.u32 %v79
    %v81 = vextract.high.u32 %v79
    %v82 = vmul.u32 %v75, %v66
    %v83 = vadd.s32 %v78, %v80
    %vm84 = vc.u32 %v78, %v80
    %v85 = vadd.s32 %v81, 1
    %v86 = vsel %vm84, %v85, %v81
    %v87 = vadd.s32 %v82, %v86
    %v88 = vadd.s32 %v87, 536870912
    %v89 = vshrl.u32 %v88, 30
    %v90 = vshll.u32 %v89, 30
    %v91 = vsub.s32 %v87, %v90
    %vm92 = vcmp.lt.s32.totalorder %v91, 0
    %v93 = vsub.s32 0, %v91
    %v94 = vsel %vm92, %v93, %v91
    %v95 = vclz %v94
    %v96 = vsub.s32 %v95, 2
    %vm97 = vcmp.gt.s32.totalorder 0, %v96
    %v98 = vsel %vm97, 0, %v96
    %v99 = vsub.s32 32, %v98
    %v100 = vshll.u32 %v91, %v98
    %v101 = vshrl.u32 %v83, %v99
    %v102 = vor.u32 %v100, %v101
    %v103 = vsub.s32 4294967266, %v98
    %v104 = vadd.s32 %v103, 127
    %v105 = vshll.u32 %v104, 23
    %v106 = vor.u32 4788187, %v105
    %v107 = vand.u32 2147483647, %v106
    %v109 = vcvt.s32.f32 %v102
    %v110 = vmul.f32 %v109, %v107
    %v111 = vxor.u32 %v110, 2147483648
    %v112 = vsel %vm29, %v111, %v110
    %v113 = vsub.s32 4, %v89
    %v114 = vsel %vm29, %v113, %v89
    %v115 = vsel %vm28, %v25, %v112
    %v116 = vsel %vm28, 0, %v114
    %v117 = vcosq.f32.pop %v115
    %v118 = vsinq.f32.pop %v115
    %vm119 = vweird.f32 %v25
    %v120 = vadd.s32 %v116, 3
    %v121 = vand.u32 %v120, 3
    %vm122 = vcmp.lt.s32.totalorder %v121, 2
    %vm123 = vcmp.eq.s32.totalorder %v121, 0
    %v124 = vxor.u32 %v118, 2147483648
    %v125 = vsel %vm123, %v117, %v124
    %vm126 = vcmp.eq.s32.totalorder %v121, 2
    %v127 = vxor.u32 %v117, 2147483648
    %v128 = vsel %vm126, %v127, %v118
    %v129 = vsel %vm122, %v125, %v128
    %v130 = vsel %vm119, nan, %v129
    %v131 = vand.u32 2147483647, %v26
    %vm132 = vcmp.le.f32.partialorder %v131, 0.7853982
    %vm133 = vcmp.lt.s32.totalorder %v26, 0
    %v134 = vand.u32 %v26, 2139095040
    %v135 = vshrl.u32 %v134, 23
    %v136 = vsub.s32 %v135, 127
    %v137 = vand.u32 2147483647, %v26
    %v138 = vand.u32 %v137, 8388607
    %v139 = vor.u32 %v138, 8388608
    %v140 = vsub.s32 0, %v139
    %v141 = vadd.s32 %v136, 1
    %vm142 = vcmp.gt.s32.totalorder %v141, 0
    %v143 = vsel %vm142, %v141, 0
    %v144 = vshrl.u32 %v143, 5
    %v145 = vand.u32 %v143, 31
    %v146 = vsub.s32 32, %v145
    %v147 = vshrl.u32 683565275, %v146
    %v148 = vshll.u32 683565275, %v145
    %v149 = vshrl.u32 2475754826, %v146
    %v150 = vor.u32 %v148, %v149
    %v151 = vshll.u32 2475754826, %v145
    %v152 = vshrl.u32 2131351028, %v146
    %v153 = vor.u32 %v151, %v152
    %v154 = vshll.u32 2131351028, %v145
    %v155 = vshrl.u32 2102212464, %v146
    %v156 = vor.u32 %v154, %v155
    %v157 = vshll.u32 2102212464, %v145
    %v158 = vshrl.u32 920167782, %v146
    %v159 = vor.u32 %v157, %v158
    %v160 = vshll.u32 920167782, %v145
    %v161 = vshrl.u32 1326507024, %v146
    %v162 = vor.u32 %v160, %v161
    %vm163 = vcmp.lt.s32.totalorder %v144, 1
    %vm164 = vcmp.lt.s32.totalorder %v144, 2
    %vm165 = vcmp.lt.s32.totalorder %v144, 3
    %vm166 = vcmp.lt.s32.totalorder %v144, 4
    %v167 = vsel %vm163, %v147, %v150
    %v168 = vsel %vm166, %v156, 2102212464
    %v169 = vsel %vm165, %v153, %v168
    %v170 = vsel %vm164, %v167, %v169
    %v171 = vsel %vm163, %v150, %v153
    %v172 = vsel %vm166, %v159, 920167782
    %v173 = vsel %vm165, %v156, %v172
    %v174 = vsel %vm164, %v171, %v173
    %v175 = vsel %vm163, %v153, %v156
    %v176 = vsel %vm166, %v162, 1326507024
    %v177 = vsel %vm165, %v159, %v176
    %v178 = vsel %vm164, %v175, %v177
    %v179 = vshll.u32 %v139, 8
    %v180 = vmul.u32.u64.compose %v179, %v178
    %v181 = vextract.low.u32 %v180
    %v182 = vextract.high.u32 %v180
    %v183 = vmul.u32.u64.compose %v179, %v174
    %v184 = vextract.low.u32 %v183
    %v185 = vextract.high.u32 %v183
    %v186 = vmul.u32 %v179, %v170
    %v187 = vadd.s32 %v182, %v184
    %vm188 = vc.u32 %v182, %v184
    %v189 = vadd.s32 %v185, 1
    %v190 = vsel %vm188, %v189, %v185
    %v191 = vadd.s32 %v186, %v190
    %v192 = vadd.s32 %v191, 536870912
    %v193 = vshrl.u32 %v192, 30
    %v194 = vshll.u32 %v193, 30
    %v195 = vsub.s32 %v191, %v194
    %vm196 = vcmp.lt.s32.totalorder %v195, 0
    %v197 = vsub.s32 0, %v195
    %v198 = vsel %vm196, %v197, %v195
    %v199 = vclz %v198
    %v200 = vsub.s32 %v199, 2
    %vm201 = vcmp.gt.s32.totalorder 0, %v200
    %v202 = vsel %vm201, 0, %v200
    %v203 = vsub.s32 32, %v202
    %v204 = vshll.u32 %v195, %v202
    %v205 = vshrl.u32 %v187, %v203
    %v206 = vor.u32 %v204, %v205
    %v207 = vsub.s32 4294967266, %v202
    %v208 = vadd.s32 %v207, 127
    %v209 = vshll.u32 %v208, 23
    %v210 = vor.u32 4788187, %v209
    %v211 = vand.u32 2147483647, %v210
    %v213 = vcvt.s32.f32 %v206
    %v214 = vmul.f32 %v213, %v211
    %v215 = vxor.u32 %v214, 2147483648
    %v216 = vsel %vm133, %v215, %v214
    %v217 = vsub.s32 4, %v193
    %v218 = vsel %vm133, %v217, %v193
    %v219 = vsel %vm132, %v26, %v216
    %v220 = vsel %vm132, 0, %v218
    %v221 = vcosq.f32.pop %v219
    %v222 = vsinq.f32.pop %v219
    %vm223 = vweird.f32 %v26
    %v224 = vadd.s32 %v220, 3
    %v225 = vand.u32 %v224, 3
    %vm226 = vcmp.lt.s32.totalorder %v225, 2
    %vm227 = vcmp.eq.s32.totalorder %v225, 0
    %v228 = vxor.u32 %v222, 2147483648
    %v229 = vsel %vm227, %v221, %v228
    %vm230 = vcmp.eq.s32.totalorder %v225, 2
    %v231 = vxor.u32 %v221, 2147483648
    %v232 = vsel %vm230, %v231, %v222
    %v233 = vsel %vm226, %v229, %v232
    %v234 = vsel %vm223, nan, %v233
    %235 = vst [vmem:[#allocation5] sm:$0xff] %v130
    %236 = vst [vmem:[#allocation5 + $0x8] sm:$0xff] %v234
    // Predicated region
    $region10: #{tpu_custom_call.1} parent=1 // pred_check
      _
    $region11: #{tpu_custom_call.1} parent=1 // pred_check_branch
      %238 = sbr.rel (0) target = $region13
    $region12: #{tpu_custom_call.1} parent=1 // pred_region
      %s240 = ssub.s32 256, 256
      %241 = vsyncadd [#allocation4], %s240
      %s242 = sshll.u32 [#allocation5], 4
      %s243 = int_to_ptr.vmem [resolvable:$true] %s242
      %248 = dma.vmem_to_hbm [thread:$0]  %s243, 256, %s1, [#allocation4], 128, 128, 8
    $region13: #{tpu_custom_call.1} parent=1 // pred_fallthru
      _
    // Predicated region
    $region14: #{tpu_custom_call.1} parent=1 // pred_check
      _
    $region15: #{tpu_custom_call.1} parent=1 // pred_check_branch
      %250 = sbr.rel (0) target = $region17
    $region16: #{tpu_custom_call.1} parent=1 // pred_region
      %251 = dma.done [#allocation4], 256
    $region17: #{tpu_custom_call.1} parent=1 // pred_fallthru
      _
    %252 = vsyncpa [#allocation3], 1
    %253 = vsyncpa [#allocation4], 1

</llo_original>
